<compile_context>
chip_gen: v5e
topology: v5e:2x2
jax: 0.10.0
libtpu: 0.0.40
codegen_flags: <defaults>
</compile_context>

<pallas_src>
import functools

import jax
import jax.numpy as jnp
from jax.experimental import pallas as pl
from jax.experimental.pallas import tpu as pltpu


def _round_up(x, m):
    return (x + m - 1) // m * m


@functools.lru_cache(maxsize=None)
def _roll_matches_jnp() -> bool:
    """One-time 4 KiB probe pinning down pltpu.roll's rotation direction.

    Makes the shift sign used for in-kernel window extraction correct regardless of
    whether pltpu.roll follows jnp.roll's convention or its inverse.
    """
    def probe(x_ref, o_ref):
        o_ref[...] = pltpu.roll(x_ref[...], 1, axis=1)

    x = jax.lax.broadcasted_iota(jnp.int32, (8, 128), 1)
    out = pl.pallas_call(
        probe, out_shape=jax.ShapeDtypeStruct((8, 128), jnp.int32))(x)
    return int(out[0, 0]) == 127   # jnp.roll(v, 1)[0] == v[-1]


@functools.partial(jax.jit,
                   static_argnames=("kernel_size", "eps", "roll_like_jnp"))
def _single_conv_block_impl(x, weight, gamma, beta, *, kernel_size, eps,
                            roll_like_jnp):
    N, Cin, D, H, W = x.shape
    Cout = weight.shape[0]
    kd, kh, kw = kernel_size
    Do, Ho, Wo = D - kd + 1, H - kh + 1, W - kw + 1   # stride=1, pad=0, dilation=1
    assert Do > 0 and Ho > 0 and Wo > 0

    # Flat-offset trick: tap (a,b,c) of output position f = d*H*W + h*W + w reads the
    # flattened input at f + off, off = a*H*W + b*W + c.
    taps = tuple(a * H * W + b * W + c
                 for a in range(kd) for b in range(kh) for c in range(kw))
    max_off = taps[-1]
    n_taps = len(taps)

    cin_pad = _round_up(Cin, 8)            # sublane-aligned channel blocks
    k_total = n_taps * cin_pad

    l_in = D * H * W
    l_over = Do * H * W                    # over-complete output length per batch

    # Flat-position tile (lanes of every block).  Review: 512-wide tiles hit ~85% of
    # the HBM roofline; halo requires tf >= max_off; shrink if the per-step VMEM
    # working set would get large (v7x has only 64 MiB VMEM).
    tf_min = max(128, _round_up(max(max_off, 1), 128))
    tf = max(tf_min, min(512, _round_up(l_over, 128)))
    while tf - 128 >= tf_min and \
            4 * tf * (2 * k_total + 6 * cin_pad + 6 * Cout) > 24 * 1024 * 1024:
        tf -= 128

    num_tiles = -(-l_over // tf)
    lp = num_tiles * tf                    # padded over-complete output length
    lx_pad = (num_tiles + 1) * tf          # input length incl. the halo tile
    assert lx_pad >= l_in and tf >= max_off

    # ---- wrapper-side prep (cheap, O(|x|); no 27x patch array) -----------------
    x_flat = x.reshape(N, Cin, l_in)
    x_pad = jnp.pad(x_flat, ((0, 0), (0, cin_pad - Cin), (0, lx_pad - l_in)))

    # weight -> (Cout, n_taps*cin_pad), rows ordered (tap, channel)
    w_t = jnp.transpose(weight, (0, 2, 3, 4, 1))                 # (Cout,kd,kh,kw,Cin)
    w_t = jnp.pad(w_t, ((0, 0), (0, 0), (0, 0), (0, 0), (0, cin_pad - Cin)))
    w2d = w_t.reshape(Cout, k_total)

    # Validity mask over over-complete flat positions (BN stats use valid ones only).
    f = jnp.arange(lp)
    mask = ((f < Do * H * W) & (((f // W) % H) < Ho) & ((f % W) < Wo))
    mask = mask.astype(jnp.float32).reshape(1, lp)

    l2 = 2 * tf

    # ---- fused conv + BN-statistics kernel --------------------------------------
    def conv_stats_kernel(w_ref, xc_ref, xn_ref, m_ref, y_ref, ps_ref, pq_ref,
                          s_sc, q_sc):
        t = pl.program_id(1)

        @pl.when(t == 0)
        def _():
            s_sc[...] = jnp.zeros_like(s_sc)
            q_sc[...] = jnp.zeros_like(q_sc)

        # current tile + halo from the next tile
        xx = jnp.concatenate([xc_ref[0], xn_ref[0]], axis=-1)    # (cin_pad, 2*tf)

        cols = []
        for off in taps:                                         # static unroll
            if off == 0:
                cols.append(xx[:, :tf])
            else:
                shift = (l2 - off) if roll_like_jnp else off
                cols.append(pltpu.roll(xx, shift, axis=1)[:, :tf])
        xcol = jnp.concatenate(cols, axis=0)                     # (k_total, tf)

        y = jnp.dot(w_ref[...], xcol, preferred_element_type=jnp.float32)
        y_ref[0] = y                                             # (Cout, tf), lane-dense

        m = m_ref[...]                                           # (1, tf)
        ym = y * m
        s_sc[...] += jnp.sum(ym, axis=-1, keepdims=True)
        q_sc[...] += jnp.sum(y * ym, axis=-1, keepdims=True)

        @pl.when(t == pl.num_programs(1) - 1)
        def _():
            ps_ref[0] = s_sc[...]
            pq_ref[0] = q_sc[...]

    y, psum, psq = pl.pallas_call(
        conv_stats_kernel,
        out_shape=(jax.ShapeDtypeStruct((N, Cout, lp), jnp.float32),
                   jax.ShapeDtypeStruct((N, Cout, 1), jnp.float32),
                   jax.ShapeDtypeStruct((N, Cout, 1), jnp.float32)),
        grid_spec=pltpu.PrefetchScalarGridSpec(
            num_scalar_prefetch=0,
            grid=(N, num_tiles),
            in_specs=[
                pl.BlockSpec((Cout, k_total), lambda n, t: (0, 0)),
                pl.BlockSpec((1, cin_pad, tf), lambda n, t: (n, 0, t)),
                pl.BlockSpec((1, cin_pad, tf), lambda n, t: (n, 0, t + 1)),
                pl.BlockSpec((1, tf), lambda n, t: (0, t)),
            ],
            out_specs=(
                pl.BlockSpec((1, Cout, tf), lambda n, t: (n, 0, t)),
                pl.BlockSpec((1, Cout, 1), lambda n, t: (n, 0, 0)),
                pl.BlockSpec((1, Cout, 1), lambda n, t: (n, 0, 0)),
            ),
            scratch_shapes=[pltpu.VMEM((Cout, 1), jnp.float32),
                            pltpu.VMEM((Cout, 1), jnp.float32)],
        ),
        # n is 'parallel' (per-batch partial stats keep megacore sharding on v7x);
        # the tile axis is 'arbitrary' because the stat accumulators span it.
        compiler_params=pltpu.CompilerParams(
            dimension_semantics=("parallel", "arbitrary"),
            vmem_limit_bytes=64 * 1024 * 1024),
    )(w2d, x_pad, x_pad, mask)

    # ---- train-mode BatchNorm parameters (per channel, valid positions only) ----
    m_valid = N * Do * Ho * Wo
    tot_s = jnp.sum(psum, axis=0)                     # (Cout, 1)
    tot_q = jnp.sum(psq, axis=0)
    mean = tot_s / m_valid
    var = tot_q / m_valid - mean * mean               # biased variance (train mode)
    inv = jax.lax.rsqrt(var + eps)
    scale = gamma.reshape(Cout, 1) * inv
    shift = beta.reshape(Cout, 1) - mean * scale

    # ---- normalize + ReLU: single FMA + max, lane-dense blocks ------------------
    def bn_relu_kernel(y_ref, sc_ref, sh_ref, o_ref):
        o_ref[0] = jnp.maximum(y_ref[0] * sc_ref[...] + sh_ref[...], 0.0)

    out_over = pl.pallas_call(
        bn_relu_kernel,
        out_shape=jax.ShapeDtypeStruct((N, Cout, lp), jnp.float32),
        grid_spec=pltpu.PrefetchScalarGridSpec(
            num_scalar_prefetch=0,
            grid=(N, num_tiles),
            in_specs=[
                pl.BlockSpec((1, Cout, tf), lambda n, t: (n, 0, t)),
                pl.BlockSpec((Cout, 1), lambda n, t: (0, 0)),
                pl.BlockSpec((Cout, 1), lambda n, t: (0, 0)),
            ],
            out_specs=pl.BlockSpec((1, Cout, tf), lambda n, t: (n, 0, t)),
        ),
        compiler_params=pltpu.CompilerParams(
            dimension_semantics=("parallel", "parallel"),
            vmem_limit_bytes=64 * 1024 * 1024),
    )(y, scale, shift)

    # Drop the over-complete (h >= Ho, w >= Wo) columns; output is already NCDHW-ordered.
    out = out_over[:, :, :Do * H * W].reshape(N, Cout, Do, H, W)
    return out[:, :, :, :Ho, :Wo]


def single_conv_block(x, weight, bias, gamma, beta, *, kernel_size, eps=1e-5):
    """SingleConvBlock forward: Conv3d(stride=1,pad=0,dil=1) -> Dropout3d(p=0)
    -> BatchNorm3d (training-mode batch statistics) -> ReLU.

    x: (N, Cin, D, H, W); weight: (Cout, Cin, kd, kh, kw); bias/gamma/beta: (Cout,).
    Returns (N, Cout, Do, Ho, Wo).
    """
    if isinstance(kernel_size, int):
        kernel_size = (kernel_size,) * 3
    del bias  # exactly cancelled by train-mode BatchNorm's mean subtraction
    # TODO(synk): Dropout3d with p != 0 and Conv3d stride/padding/dilation other than
    # the module defaults (1, 0, 1) are not implemented.
    return _single_conv_block_impl(
        x, weight, gamma, beta,
        kernel_size=tuple(int(k) for k in kernel_size), eps=float(eps),
        roll_like_jnp=_roll_matches_jnp())


if __name__ == "__main__":
    key = jax.random.PRNGKey(0)
    k_x, k_w, k_b = jax.random.split(key, 3)

    N, Cin, Cout = 2, 4, 8
    D = H = W = 8
    ks = (3, 3, 3)

    x = jax.random.normal(k_x, (N, Cin, D, H, W), dtype=jnp.float32)

    # Deterministic parameter init (PyTorch-style uniform bounds for Conv3d).
    fan_in = Cin * ks[0] * ks[1] * ks[2]
    bound = 1.0 / (fan_in ** 0.5)
    weight = jax.random.uniform(k_w, (Cout, Cin) + ks, jnp.float32, -bound, bound)
    bias = jax.random.uniform(k_b, (Cout,), jnp.float32, -bound, bound)
    gamma = jnp.ones((Cout,), jnp.float32)   # BatchNorm3d default affine init
    beta = jnp.zeros((Cout,), jnp.float32)

    out = single_conv_block(x, weight, bias, gamma, beta, kernel_size=ks)
    jax.block_until_ready(out)

    assert out.shape == (N, Cout, D - 2, H - 2, W - 2), out.shape
    print("KERNEL_OK")
</pallas_src>

<mosaic_0001>
module attributes {stable_mosaic.version = 11 : i64} {
  func.func @probe(%arg0: memref<8x128xi32, #tpu.memory_space<vmem>>, %arg1: memref<8x128xi32, #tpu.memory_space<vmem>>) attributes {dimension_semantics = [], scalar_prefetch = 0 : i64, scratch_operands = 0 : i64, tpu.core_type = #tpu.core_type<tc>} {
    %c0 = arith.constant 0 : index
    %c0_0 = arith.constant 0 : index
    %0 = vector.load %arg0[%c0, %c0_0] : memref<8x128xi32, #tpu.memory_space<vmem>>, vector<8x128xi32>
    %c1_i32 = arith.constant 1 : i32
    %1 = tpu.dynamic_rotate %0 by %c1_i32 dim 1 : vector<8x128xi32>, i32 -> vector<8x128xi32>
    %c0_1 = arith.constant 0 : index
    %c0_2 = arith.constant 0 : index
    %2 = vector.load %arg1[%c0_1, %c0_2] : memref<8x128xi32, #tpu.memory_space<vmem>>, vector<8x128xi32>
    tpu.vector_store %arg1[%c0_1, %c0_2], %1 {strides = array<i32>} : memref<8x128xi32, #tpu.memory_space<vmem>>, vector<8x128xi32>,
    return
  }
}

</mosaic_0001>

<llo_original>
// kernel: tpu_custom_call.1
$region0: #{tpu_custom_call.1}
  #allocation0 [shape = 'u32[]', space=smem, size = 0x4, offset = 0x4, fixed_abs, tag = 'smem constant byte address 0x4 - core index']
  #allocation1 [shape = 'u32[72,128]{1,0:T(1,128)}', space=vmem, size = 0x9000, scoped, tag = 'internal scratch']
  %s0 = inlined_call_operand.hbm [shape: s32[8,128], index: 0, kind: input, shape index: {}]
  %s1 = inlined_call_operand.hbm [shape: s32[8,128], index: 1, kind: output, shape index: {}]
  %s2 = sld [smem:[#allocation0]]
  $region18: #{tpu_custom_call.1} parent=0
    _
  %s4 = ssub.s32 1, %s2
  %s5 = scalar_select 0, %s4, %s2
  $region1: #{tpu_custom_call.1} parent=0
    #allocation2 [shape = 'u8[4096]{0}', space=vmem, size = 0x1000, scoped, tag = 'input window, operand 0, single buffered']
    #allocation3 [shape = 's32[1]{0}', space=sflag, size = 0x4, scoped, tag = 'scoped memory for tpu_custom_call.1']
    #allocation4 [shape = 's32[1]{0}', space=sflag, size = 0x4, scoped, tag = 'scoped memory for tpu_custom_call.1']
    #allocation5 [shape = 'u8[4096]{0}', space=vmem, size = 0x1000, scoped, tag = 'output window, operand 0, single buffered']
    %6 = vsyncpa [#allocation3], 0
    %7 = vsyncpa [#allocation4], 0
    // Predicated region
    $region2: #{tpu_custom_call.1} parent=1 // pred_check
      _
    $region3: #{tpu_custom_call.1} parent=1 // pred_check_branch
      %9 = sbr.rel (0) target = $region5
    $region4: #{tpu_custom_call.1} parent=1 // pred_region
      %11 = vsyncadd [#allocation3], 0
      %s13 = sshll.u32 %s0, 4
      %s14 = int_to_ptr.hbm [resolvable:$true] %s13
      %s15 = sshll.u32 [#allocation2], 4
      %s16 = int_to_ptr.vmem [resolvable:$true] %s15
      %18 = dma.hbm_to_vmem [thread:$0]  %s14, 128, %s16, [#allocation3]
    $region5: #{tpu_custom_call.1} parent=1 // pred_fallthru
      _
    // Predicated region
    $region6: #{tpu_custom_call.1} parent=1 // pred_check
      _
    $region7: #{tpu_custom_call.1} parent=1 // pred_check_branch
      %20 = sbr.rel (0) target = $region9
    $region8: #{tpu_custom_call.1} parent=1 // pred_region
      %22 = dma.done [#allocation3], 128
    $region9: #{tpu_custom_call.1} parent=1 // pred_fallthru
      _
    %v23 = vld [vmem:[#allocation2] sm:$0xff]
    %24 = vrot.lane.b32.xlu0 %v23, 1
    %v25 = vpop.permute.xlu0 %24
    %26 = vst [vmem:[#allocation5] sm:$0xff] %v25
    // Predicated region
    $region10: #{tpu_custom_call.1} parent=1 // pred_check
      _
    $region11: #{tpu_custom_call.1} parent=1 // pred_check_branch
      %28 = sbr.rel (0) target = $region13
    $region12: #{tpu_custom_call.1} parent=1 // pred_region
      %30 = vsyncadd [#allocation4], 0
      %s32 = sshll.u32 [#allocation5], 4
      %s33 = int_to_ptr.vmem [resolvable:$true] %s32
      %s34 = sshll.u32 %s1, 4
      %s35 = int_to_ptr.hbm [resolvable:$true] %s34
      %37 = dma.vmem_to_hbm [thread:$0]  %s33, 128, %s35, [#allocation4]
    $region13: #{tpu_custom_call.1} parent=1 // pred_fallthru
      _
    // Predicated region
    $region14: #{tpu_custom_call.1} parent=1 // pred_check
      _
    $region15: #{tpu_custom_call.1} parent=1 // pred_check_branch
      %39 = sbr.rel (0) target = $region17
    $region16: #{tpu_custom_call.1} parent=1 // pred_region
      %41 = dma.done [#allocation4], 128
    $region17: #{tpu_custom_call.1} parent=1 // pred_fallthru
      _
    %42 = vsyncpa [#allocation3], 1
    %43 = vsyncpa [#allocation4], 1

</llo_original>
